<compile_context>
chip_gen: v7x
topology: tpu7x:2x2x1
jax: 0.10.0
libtpu: 0.0.40
codegen_flags: <defaults>
</compile_context>

<pallas_src>
import functools

import jax
import jax.numpy as jnp
from jax.experimental import pallas as pl
from jax.experimental.pallas import tpu as pltpu


# ----------------------------------------------------------------------------
# Fused kernel: TPGM projection of both weights + conv3x3 -> ReLU -> conv1x1
# ----------------------------------------------------------------------------
def _tpgm_fused_kernel(w1n_ref, w1a_ref, w2n_ref, w2a_ref, pT_ref,
                       o_ref, c1_ref, c2_ref, *, compute_dtype):
    def project(new_w, anchor_w):
        t = new_w - anchor_w                                      # delta
        norms = jnp.sum(jnp.abs(t), axis=1, keepdims=True)        # per-row L1, (R, 1)
        c = jnp.min(norms, keepdims=True) * 0.5                   # init: min(norms)/2
        c = jnp.clip(c, 1e-8, jnp.max(norms, keepdims=True))      # _clip: hardtanh(1e-8, max)
        ratio = jnp.clip(c / (norms + 1e-8), 0.0, 1.0)            # Hardtanh(0, 1)
        return anchor_w + t * ratio, c                            # projected, constraint (1,1)

    # Tiny (8x36 / 8x8) projections: a few hundred VPU ops, fused in-kernel.
    w1p, c1 = project(w1n_ref[...], w1a_ref[...])
    w2p, c2 = project(w2n_ref[...], w2a_ref[...])

    # Lane-dense matmul chain: lane axis = pixels.
    pT = pT_ref[...]                                              # (K1, tm)
    h = jnp.dot(w1p.astype(compute_dtype), pT.astype(compute_dtype),
                preferred_element_type=jnp.float32)               # (C1, tm)
    h = jnp.maximum(h, 0.0)                                       # ReLU
    o_ref[...] = jnp.dot(w2p.astype(compute_dtype), h.astype(compute_dtype),
                         preferred_element_type=jnp.float32)      # (C2, tm)

    # Constraints: one (1,1) slot per grid step (written once when grid=(1,));
    # per-step slots keep this race-free if the pixel axis is ever sharded.
    c1_ref[0] = c1
    c2_ref[0] = c2


# ----------------------------------------------------------------------------
# Glue: im2col for the 3x3 / padding=1 conv, emitted directly as (C*9, B*H*W)
# without a 5-D relayout (single up-front (B,C,..)->(C,B,..) transpose, fused
# away under jit).
# ----------------------------------------------------------------------------
def im2col_3x3_same_t(x):
    """x: (B, C, H, W) NCHW -> patches^T (C*9, B*H*W); row order (c, kh, kw)
    matches the OIHW weight flatten; column order is (b, h, w)."""
    B, C, H, W = x.shape
    xc = jnp.transpose(x, (1, 0, 2, 3))                           # (C, B, H, W)
    xp = jnp.pad(xc, ((0, 0), (0, 0), (1, 1), (1, 1)))            # (C, B, H+2, W+2)
    rows = [xp[:, :, kh:kh + H, kw:kw + W]                        # each (C, B, H, W)
            for kh in range(3) for kw in range(3)]
    p = jnp.stack(rows, axis=1)                                   # (C, 9, B, H, W) final order
    return p.reshape(C * 9, B * H * W)


# ----------------------------------------------------------------------------
# TPGM.forward (apply=False): project params, run model, slice channels.
# Whole thing is jitted so the im2col / pad / reshape glue fuses with the
# pallas_call into one dispatch.
# ----------------------------------------------------------------------------
def _tpgm_forward_impl(x, w1_new, w1_anchor, w2_new, w2_anchor, *,
                       active_classes=None, tm=None, compute_dtype=jnp.float32):
    B, C_in, H, W = x.shape
    C1 = w1_new.shape[0]
    C2 = w2_new.shape[0]
    K1 = C_in * 9
    M = B * H * W

    # Thin (jit-fused) glue: build patches^T with the pixel axis last (lanes).
    patches_t = im2col_3x3_same_t(x.astype(jnp.float32))          # (K1, M)

    # tm=None -> single tile covering the whole (128-aligned) pixel axis:
    # grid=(1,), one projection, contiguous DMA, constraints written once.
    # For large M pick tm explicitly (and on v7x cap it against 64 MiB VMEM,
    # setting pltpu.CompilerParams(vmem_limit_bytes=...)).
    if tm is None:
        m_pad = max(128, pl.cdiv(M, 128) * 128)
        tm_eff = m_pad
    else:
        tm_eff = tm
        m_pad = pl.cdiv(M, tm_eff) * tm_eff
    if m_pad != M:
        patches_t = jnp.pad(patches_t, ((0, 0), (0, m_pad - M)))  # zero cols -> zero output
    grid_m = m_pad // tm_eff

    out_cm, c1_arr, c2_arr = pl.pallas_call(
        functools.partial(_tpgm_fused_kernel, compute_dtype=compute_dtype),
        out_shape=(
            jax.ShapeDtypeStruct((C2, m_pad), jnp.float32),       # (Cout, pixels)
            jax.ShapeDtypeStruct((grid_m, 1, 1), jnp.float32),    # constraint 1
            jax.ShapeDtypeStruct((grid_m, 1, 1), jnp.float32),    # constraint 2
        ),
        grid=(grid_m,),
        in_specs=[
            pl.BlockSpec((C1, K1), lambda i: (0, 0)),             # w1 new (PyTorch flatten)
            pl.BlockSpec((C1, K1), lambda i: (0, 0)),             # w1 anchor
            pl.BlockSpec((C2, C1), lambda i: (0, 0)),             # w2 new
            pl.BlockSpec((C2, C1), lambda i: (0, 0)),             # w2 anchor
            pl.BlockSpec((K1, tm_eff), lambda i: (0, i)),         # patches^T tile
        ],
        out_specs=(
            pl.BlockSpec((C2, tm_eff), lambda i: (0, i)),
            pl.BlockSpec((1, 1, 1), lambda i: (i, 0, 0)),
            pl.BlockSpec((1, 1, 1), lambda i: (i, 0, 0)),
        ),
        compiler_params=pltpu.CompilerParams(
            dimension_semantics=("parallel",) if grid_m > 1 else ("arbitrary",)),
    )(
        w1_new.reshape(C1, K1).astype(jnp.float32),
        w1_anchor.reshape(C1, K1).astype(jnp.float32),
        w2_new.reshape(C2, C1).astype(jnp.float32),
        w2_anchor.reshape(C2, C1).astype(jnp.float32),
        patches_t,
    )

    n_out = C2 if active_classes is None else active_classes
    out = out_cm[:n_out, :M].reshape(n_out, B, H, W).transpose(1, 0, 2, 3)  # NCHW
    return out, (c1_arr[0], c2_arr[0])                            # each (1, 1)


tpgm_forward = jax.jit(
    _tpgm_forward_impl,
    static_argnames=("active_classes", "tm", "compute_dtype"))


# ----------------------------------------------------------------------------
# Pure-JAX reference (for correctness check)
# ----------------------------------------------------------------------------
def _reference_forward(x, w1_new, w1_anchor, w2_new, w2_anchor, active_classes):
    def project(nw, aw):
        t = nw - aw
        norms = jnp.sum(jnp.abs(t.reshape(t.shape[0], -1)), axis=1, keepdims=True)
        c = jnp.clip(jnp.min(norms) / 2.0, 1e-8, jnp.max(norms))
        ratio = jnp.clip(c / (norms + 1e-8), 0.0, 1.0)
        ratio = ratio.reshape((t.shape[0],) + (1,) * (t.ndim - 1))
        return aw + t * ratio, c

    w1p, c1 = project(w1_new, w1_anchor)
    w2p, c2 = project(w2_new, w2_anchor)
    dn = ("NCHW", "OIHW", "NCHW")
    h = jax.lax.conv_general_dilated(x, w1p, (1, 1), "SAME", dimension_numbers=dn)
    h = jnp.maximum(h, 0.0)
    o = jax.lax.conv_general_dilated(h, w2p, (1, 1), "SAME", dimension_numbers=dn)
    return o[:, :active_classes, :, :], (c1, c2)


if __name__ == "__main__":
    key = jax.random.PRNGKey(0)
    kx, k1n, k1a, k2n, k2a = jax.random.split(key, 5)

    B, C_in, H, W = 2, 4, 16, 16
    C1, C2 = 8, 8
    active_classes = 6

    x = jax.random.normal(kx, (B, C_in, H, W), dtype=jnp.float32)
    # "new" (fine-tuned) params and "pre_trained" (anchor) params.
    w1_anchor = 0.1 * jax.random.normal(k1a, (C1, C_in, 3, 3), dtype=jnp.float32)
    w1_new = w1_anchor + 0.05 * jax.random.normal(k1n, (C1, C_in, 3, 3), dtype=jnp.float32)
    w2_anchor = 0.1 * jax.random.normal(k2a, (C2, C1, 1, 1), dtype=jnp.float32)
    w2_new = w2_anchor + 0.05 * jax.random.normal(k2n, (C2, C1, 1, 1), dtype=jnp.float32)

    out, (c1, c2) = tpgm_forward(x, w1_new, w1_anchor, w2_new, w2_anchor,
                                 active_classes=active_classes)
    out = jax.block_until_ready(out)

    ref_out, (rc1, rc2) = _reference_forward(x, w1_new, w1_anchor, w2_new, w2_anchor,
                                             active_classes)
    assert out.shape == (B, active_classes, H, W)
    assert bool(jnp.allclose(out, ref_out, atol=1e-4, rtol=1e-4)), "output mismatch vs reference"
    assert bool(jnp.allclose(c1[0, 0], rc1, atol=1e-6, rtol=1e-5)), "constraint 1 mismatch"
    assert bool(jnp.allclose(c2[0, 0], rc2, atol=1e-6, rtol=1e-5)), "constraint 2 mismatch"

    print("KERNEL_OK")
</pallas_src>

<mosaic_0001>
module attributes {stable_mosaic.version = 11 : i64} {
  func.func @_tpgm_fused_kernel(%arg0: i32, %arg1: memref<8x36xf32, #tpu.memory_space<vmem>>, %arg2: memref<8x36xf32, #tpu.memory_space<vmem>>, %arg3: memref<8x8xf32, #tpu.memory_space<vmem>>, %arg4: memref<8x8xf32, #tpu.memory_space<vmem>>, %arg5: memref<36x512xf32, #tpu.memory_space<vmem>>, %arg6: memref<8x512xf32, #tpu.memory_space<vmem>>, %arg7: memref<1x1x1xf32, #tpu.memory_space<vmem>>, %arg8: memref<1x1x1xf32, #tpu.memory_space<vmem>>) attributes {dimension_semantics = [#tpu.dimension_semantics<arbitrary>], iteration_bounds = array<i64: 1>, scalar_prefetch = 0 : i64, scratch_operands = 0 : i64, tpu.core_type = #tpu.core_type<tc>, window_params = [{pipeline_mode = #tpu.pipeline_mode<synchronous>, transform_indices = @transform_0, window_bounds = array<i64: 8, 36>}, {pipeline_mode = #tpu.pipeline_mode<synchronous>, transform_indices = @transform_1, window_bounds = array<i64: 8, 36>}, {pipeline_mode = #tpu.pipeline_mode<synchronous>, transform_indices = @transform_2, window_bounds = array<i64: 8, 8>}, {pipeline_mode = #tpu.pipeline_mode<synchronous>, transform_indices = @transform_3, window_bounds = array<i64: 8, 8>}, {transform_indices = @transform_4, window_bounds = array<i64: 36, 512>}, {transform_indices = @transform_5, window_bounds = array<i64: 8, 512>}, {transform_indices = @transform_6, window_bounds = array<i64: 1, 1, 1>}, {transform_indices = @transform_7, window_bounds = array<i64: 1, 1, 1>}]} {
    %c0 = arith.constant 0 : index
    %c0_0 = arith.constant 0 : index
    %0 = vector.load %arg1[%c0, %c0_0] : memref<8x36xf32, #tpu.memory_space<vmem>>, vector<8x36xf32>
    %c0_1 = arith.constant 0 : index
    %c0_2 = arith.constant 0 : index
    %1 = vector.load %arg2[%c0_1, %c0_2] : memref<8x36xf32, #tpu.memory_space<vmem>>, vector<8x36xf32>
    %2 = arith.subf %0, %1 : vector<8x36xf32>
    %3 = math.absf %2 : vector<8x36xf32>
    %cst = arith.constant dense<0.000000e+00> : vector<8xf32>
    %4 = vector.multi_reduction <add>, %3, %cst [1] : vector<8x36xf32> to vector<8xf32>
    %5 = vector.shape_cast %4 : vector<8xf32> to vector<8x1xf32>
    %6 = vector.shape_cast %5 : vector<8x1xf32> to vector<1x8x1xf32>
    %cst_3 = arith.constant dense<0x7F800000> : vector<1xf32>
    %7 = vector.multi_reduction <minimumf>, %6, %cst_3 [1, 2] : vector<1x8x1xf32> to vector<1xf32>
    %8 = vector.shape_cast %7 : vector<1xf32> to vector<1x1x1xf32>
    %9 = vector.extract %8[0, 0, 0] : f32 from vector<1x1x1xf32>
    %10 = vector.broadcast %9 : f32 to vector<1x1xf32>
    %cst_4 = arith.constant 5.000000e-01 : f32
    %11 = vector.broadcast %cst_4 : f32 to vector<1x1xf32>
    %12 = arith.mulf %10, %11 : vector<1x1xf32>
    %13 = vector.shape_cast %5 : vector<8x1xf32> to vector<1x8x1xf32>
    %cst_5 = arith.constant dense<0xFF800000> : vector<1xf32>
    %14 = vector.multi_reduction <maximumf>, %13, %cst_5 [1, 2] : vector<1x8x1xf32> to vector<1xf32>
    %15 = vector.shape_cast %14 : vector<1xf32> to vector<1x1x1xf32>
    %16 = vector.extract %15[0, 0, 0] : f32 from vector<1x1x1xf32>
    %17 = vector.broadcast %16 : f32 to vector<1x1xf32>
    %cst_6 = arith.constant 9.99999993E-9 : f32
    %18 = vector.broadcast %cst_6 : f32 to vector<1x1xf32>
    %19 = arith.maximumf %18, %12 : vector<1x1xf32>
    %20 = arith.minimumf %17, %19 : vector<1x1xf32>
    %cst_7 = arith.constant 9.99999993E-9 : f32
    %21 = vector.broadcast %cst_7 : f32 to vector<8x1xf32>
    %22 = arith.addf %5, %21 : vector<8x1xf32>
    %23 = vector.broadcast %20 : vector<1x1xf32> to vector<8x1xf32>
    %24 = arith.divf %23, %22 : vector<8x1xf32>
    %cst_8 = arith.constant 0.000000e+00 : f32
    %cst_9 = arith.constant 1.000000e+00 : f32
    %25 = vector.broadcast %cst_8 : f32 to vector<8x1xf32>
    %26 = arith.maximumf %25, %24 : vector<8x1xf32>
    %27 = vector.broadcast %cst_9 : f32 to vector<8x1xf32>
    %28 = arith.minimumf %27, %26 : vector<8x1xf32>
    %29 = vector.broadcast %28 : vector<8x1xf32> to vector<8x36xf32>
    %30 = arith.mulf %2, %29 : vector<8x36xf32>
    %31 = arith.addf %1, %30 : vector<8x36xf32>
    %c0_10 = arith.constant 0 : index
    %c0_11 = arith.constant 0 : index
    %32 = vector.load %arg3[%c0_10, %c0_11] : memref<8x8xf32, #tpu.memory_space<vmem>>, vector<8x8xf32>
    %c0_12 = arith.constant 0 : index
    %c0_13 = arith.constant 0 : index
    %33 = vector.load %arg4[%c0_12, %c0_13] : memref<8x8xf32, #tpu.memory_space<vmem>>, vector<8x8xf32>
    %34 = arith.subf %32, %33 : vector<8x8xf32>
    %35 = math.absf %34 : vector<8x8xf32>
    %cst_14 = arith.constant dense<0.000000e+00> : vector<8xf32>
    %36 = vector.multi_reduction <add>, %35, %cst_14 [1] : vector<8x8xf32> to vector<8xf32>
    %37 = vector.shape_cast %36 : vector<8xf32> to vector<8x1xf32>
    %38 = vector.shape_cast %37 : vector<8x1xf32> to vector<1x8x1xf32>
    %cst_15 = arith.constant dense<0x7F800000> : vector<1xf32>
    %39 = vector.multi_reduction <minimumf>, %38, %cst_15 [1, 2] : vector<1x8x1xf32> to vector<1xf32>
    %40 = vector.shape_cast %39 : vector<1xf32> to vector<1x1x1xf32>
    %41 = vector.extract %40[0, 0, 0] : f32 from vector<1x1x1xf32>
    %42 = vector.broadcast %41 : f32 to vector<1x1xf32>
    %cst_16 = arith.constant 5.000000e-01 : f32
    %43 = vector.broadcast %cst_16 : f32 to vector<1x1xf32>
    %44 = arith.mulf %42, %43 : vector<1x1xf32>
    %45 = vector.shape_cast %37 : vector<8x1xf32> to vector<1x8x1xf32>
    %cst_17 = arith.constant dense<0xFF800000> : vector<1xf32>
    %46 = vector.multi_reduction <maximumf>, %45, %cst_17 [1, 2] : vector<1x8x1xf32> to vector<1xf32>
    %47 = vector.shape_cast %46 : vector<1xf32> to vector<1x1x1xf32>
    %48 = vector.extract %47[0, 0, 0] : f32 from vector<1x1x1xf32>
    %49 = vector.broadcast %48 : f32 to vector<1x1xf32>
    %cst_18 = arith.constant 9.99999993E-9 : f32
    %50 = vector.broadcast %cst_18 : f32 to vector<1x1xf32>
    %51 = arith.maximumf %50, %44 : vector<1x1xf32>
    %52 = arith.minimumf %49, %51 : vector<1x1xf32>
    %cst_19 = arith.constant 9.99999993E-9 : f32
    %53 = vector.broadcast %cst_19 : f32 to vector<8x1xf32>
    %54 = arith.addf %37, %53 : vector<8x1xf32>
    %55 = vector.broadcast %52 : vector<1x1xf32> to vector<8x1xf32>
    %56 = arith.divf %55, %54 : vector<8x1xf32>
    %cst_20 = arith.constant 0.000000e+00 : f32
    %cst_21 = arith.constant 1.000000e+00 : f32
    %57 = vector.broadcast %cst_20 : f32 to vector<8x1xf32>
    %58 = arith.maximumf %57, %56 : vector<8x1xf32>
    %59 = vector.broadcast %cst_21 : f32 to vector<8x1xf32>
    %60 = arith.minimumf %59, %58 : vector<8x1xf32>
    %61 = vector.broadcast %60 : vector<8x1xf32> to vector<8x8xf32>
    %62 = arith.mulf %34, %61 : vector<8x8xf32>
    %63 = arith.addf %33, %62 : vector<8x8xf32>
    %c0_22 = arith.constant 0 : index
    %c0_23 = arith.constant 0 : index
    %64 = vector.load %arg5[%c0_22, %c0_23] : memref<36x512xf32, #tpu.memory_space<vmem>>, vector<36x512xf32>
    %cst_24 = arith.constant dense<0.000000e+00> : vector<8x512xf32>
    %65 = tpu.matmul %31, %64, %cst_24 {dimension_numbers = #tpu.dot_dimension_numbers<[1], [0], [0], [1], [0, 0, 1, 1], [], []>} : vector<8x36xf32>, vector<36x512xf32>, vector<8x512xf32> -> vector<8x512xf32>
    %cst_25 = arith.constant 0.000000e+00 : f32
    %66 = vector.broadcast %cst_25 : f32 to vector<8x512xf32>
    %67 = arith.maximumf %65, %66 : vector<8x512xf32>
    %cst_26 = arith.constant dense<0.000000e+00> : vector<8x512xf32>
    %68 = tpu.matmul %63, %67, %cst_26 {dimension_numbers = #tpu.dot_dimension_numbers<[1], [0], [0], [1], [0, 0, 1, 1], [], []>} : vector<8x8xf32>, vector<8x512xf32>, vector<8x512xf32> -> vector<8x512xf32>
    %c0_27 = arith.constant 0 : index
    %c0_28 = arith.constant 0 : index
    %69 = vector.load %arg6[%c0_27, %c0_28] : memref<8x512xf32, #tpu.memory_space<vmem>>, vector<8x512xf32>
    tpu.vector_store %arg6[%c0_27, %c0_28], %68 {strides = array<i32>} : memref<8x512xf32, #tpu.memory_space<vmem>>, vector<8x512xf32>,
    %c0_29 = arith.constant 0 : index
    %c0_30 = arith.constant 0 : index
    %c0_31 = arith.constant 0 : index
    %70 = vector.load %arg7[%c0_29, %c0_30, %c0_31] : memref<1x1x1xf32, #tpu.memory_space<vmem>>, vector<1x1x1xf32>
    %71 = vector.shape_cast %70 : vector<1x1x1xf32> to vector<1x1xf32>
    %72 = vector.shape_cast %20 : vector<1x1xf32> to vector<1x1x1xf32>
    tpu.vector_store %arg7[%c0_29, %c0_30, %c0_31], %72 {strides = array<i32>} : memref<1x1x1xf32, #tpu.memory_space<vmem>>, vector<1x1x1xf32>,
    %c0_32 = arith.constant 0 : index
    %c0_33 = arith.constant 0 : index
    %c0_34 = arith.constant 0 : index
    %73 = vector.load %arg8[%c0_32, %c0_33, %c0_34] : memref<1x1x1xf32, #tpu.memory_space<vmem>>, vector<1x1x1xf32>
    %74 = vector.shape_cast %73 : vector<1x1x1xf32> to vector<1x1xf32>
    %75 = vector.shape_cast %52 : vector<1x1xf32> to vector<1x1x1xf32>
    tpu.vector_store %arg8[%c0_32, %c0_33, %c0_34], %75 {strides = array<i32>} : memref<1x1x1xf32, #tpu.memory_space<vmem>>, vector<1x1x1xf32>,
    return
  }
  func.func @transform_0(%arg0: i32) -> (i32, i32) {
    %c0_i32 = arith.constant 0 : i32
    %c0_i32_0 = arith.constant 0 : i32
    %c0_i32_1 = arith.constant 0 : i32
    return %c0_i32, %c0_i32_0 : i32, i32
  }
  func.func @transform_1(%arg0: i32) -> (i32, i32) {
    %c0_i32 = arith.constant 0 : i32
    %c0_i32_0 = arith.constant 0 : i32
    %c0_i32_1 = arith.constant 0 : i32
    return %c0_i32, %c0_i32_0 : i32, i32
  }
  func.func @transform_2(%arg0: i32) -> (i32, i32) {
    %c0_i32 = arith.constant 0 : i32
    %c0_i32_0 = arith.constant 0 : i32
    %c0_i32_1 = arith.constant 0 : i32
    return %c0_i32, %c0_i32_0 : i32, i32
  }
  func.func @transform_3(%arg0: i32) -> (i32, i32) {
    %c0_i32 = arith.constant 0 : i32
    %c0_i32_0 = arith.constant 0 : i32
    %c0_i32_1 = arith.constant 0 : i32
    return %c0_i32, %c0_i32_0 : i32, i32
  }
  func.func @transform_4(%arg0: i32) -> (i32, i32) {
    %c0_i32 = arith.constant 0 : i32
    %c0_i32_0 = arith.constant 0 : i32
    return %c0_i32, %arg0 : i32, i32
  }
  func.func @transform_5(%arg0: i32) -> (i32, i32) {
    %c0_i32 = arith.constant 0 : i32
    %c0_i32_0 = arith.constant 0 : i32
    return %c0_i32, %arg0 : i32, i32
  }
  func.func @transform_6(%arg0: i32) -> (i32, i32, i32) {
    %c0_i32 = arith.constant 0 : i32
    %c0_i32_0 = arith.constant 0 : i32
    %c0_i32_1 = arith.constant 0 : i32
    return %arg0, %c0_i32, %c0_i32_0 : i32, i32, i32
  }
  func.func @transform_7(%arg0: i32) -> (i32, i32, i32) {
    %c0_i32 = arith.constant 0 : i32
    %c0_i32_0 = arith.constant 0 : i32
    %c0_i32_1 = arith.constant 0 : i32
    return %arg0, %c0_i32, %c0_i32_0 : i32, i32, i32
  }
}

</mosaic_0001>

<llo_original>
// kernel: _tpgm_forward_impl.1
$region0: #{_tpgm_forward_impl.1}
  #allocation0 [shape = 'u32[]', space=smem, size = 0x4, offset = 0x4, fixed_abs, tag = 'smem constant byte address 0x4 - core index']
  #allocation1 [shape = 'u32[144,128]{1,0:T(1,128)}', space=vmem, size = 0x12000, scoped, tag = 'internal scratch']
  %s0 = inlined_call_operand.vmem [shape: f32[8,36], index: 0, kind: input, shape index: {}]
  %s1 = inlined_call_operand.vmem [shape: f32[8,36], index: 1, kind: input, shape index: {}]
  %s2 = inlined_call_operand.vmem [shape: f32[8,8], index: 2, kind: input, shape index: {}]
  %s3 = inlined_call_operand.vmem [shape: f32[8,8], index: 3, kind: input, shape index: {}]
  %s4 = inlined_call_operand.vmem [shape: f32[36,512], index: 4, kind: input, shape index: {}]
  %s5 = inlined_call_operand.vmem [shape: f32[8,512], index: 5, kind: output, shape index: {0}]
  %s6 = inlined_call_operand.hbm [shape: f32[1,1,1], index: 6, kind: output, shape index: {1}]
  %s7 = inlined_call_operand.hbm [shape: f32[1,1,1], index: 7, kind: output, shape index: {2}]
  %8 = xla_tuple %s5, %s6, %s7
  %s9 = sld [smem:[#allocation0]]
  $region46: #{_tpgm_forward_impl.1} parent=0
    _
  %s11 = ssub.s32 1, %s9
  %s12 = scalar_select 0, %s11, %s9
  $region1: #{_tpgm_forward_impl.1} parent=0
    #allocation2 [shape = 'u8[512]{0}', space=vmem, size = 0x400, scoped, tag = 'output window, operand 1, single buffered']
    #allocation3 [shape = 's32[1]{0}', space=sflag, size = 0x4, scoped, tag = 'scoped memory for _tpgm_forward_impl.1']
    #allocation4 [shape = 'u8[512]{0}', space=vmem, size = 0x400, scoped, tag = 'output window, operand 2, single buffered']
    #allocation5 [shape = 's32[1]{0}', space=sflag, size = 0x4, scoped, tag = 'scoped memory for _tpgm_forward_impl.1']
    %13 = vsyncpa [#allocation3], 0
    %14 = vsyncpa [#allocation5], 0
    // Predicated region
    $region2: #{_tpgm_forward_impl.1} parent=1 // pred_check
      _
    $region3: #{_tpgm_forward_impl.1} parent=1 // pred_check_branch
      %16 = sbr.rel (0) target = $region5
    $region4: #{_tpgm_forward_impl.1} parent=1 // pred_region
      _
    $region5: #{_tpgm_forward_impl.1} parent=1 // pred_fallthru
      _
    // Predicated region
    $region6: #{_tpgm_forward_impl.1} parent=1 // pred_check
      _
    $region7: #{_tpgm_forward_impl.1} parent=1 // pred_check_branch
      %18 = sbr.rel (0) target = $region9
    $region8: #{_tpgm_forward_impl.1} parent=1 // pred_region
      _
    $region9: #{_tpgm_forward_impl.1} parent=1 // pred_fallthru
      _
    // Predicated region
    $region10: #{_tpgm_forward_impl.1} parent=1 // pred_check
      _
    $region11: #{_tpgm_forward_impl.1} parent=1 // pred_check_branch
      %20 = sbr.rel (0) target = $region13
    $region12: #{_tpgm_forward_impl.1} parent=1 // pred_region
      _
    $region13: #{_tpgm_forward_impl.1} parent=1 // pred_fallthru
      _
    // Predicated region
    $region14: #{_tpgm_forward_impl.1} parent=1 // pred_check
      _
    $region15: #{_tpgm_forward_impl.1} parent=1 // pred_check_branch
      %22 = sbr.rel (0) target = $region17
    $region16: #{_tpgm_forward_impl.1} parent=1 // pred_region
      _
    $region17: #{_tpgm_forward_impl.1} parent=1 // pred_fallthru
      _
    // Predicated region
    $region18: #{_tpgm_forward_impl.1} parent=1 // pred_check
      _
    $region19: #{_tpgm_forward_impl.1} parent=1 // pred_check_branch
      %24 = sbr.rel (0) target = $region21
    $region20: #{_tpgm_forward_impl.1} parent=1 // pred_region
      _
    $region21: #{_tpgm_forward_impl.1} parent=1 // pred_fallthru
      _
    %v25 = vld [vmem:[%s0] sm:$0xff]
    %v26 = vld [vmem:[%s1] sm:$0xff]
    %v27 = vsub.f32 %v25, %v26
    %v28 = vand.u32 2147483647, %v27
    %vm29 = vcmask 293888
    %v30 = vsel %vm29, %v28, 0.0
    %31 = vadd.xlane.f32.xlu0 %v30
    %v32 = vpop.xlane.xlu0 %31
    %v33 = vrot.slane %v32, 4
    %v34 = vmin.f32 %v32, %v33
    %v35 = vrot.slane %v34, 2
    %v36 = vmin.f32 %v34, %v35
    %v37 = vrot.slane %v36, 1
    %v38 = vmin.f32 %v36, %v37
    %s39 = vtos %v38
    %v40 = vstv %s39
    %v41 = vmul.f32 %v40, 0.5
    %v42 = vrot.slane %v32, 4
    %v43 = vmax.f32 %v32, %v42
    %v44 = vrot.slane %v43, 2
    %v45 = vmax.f32 %v43, %v44
    %v46 = vrot.slane %v45, 1
    %v47 = vmax.f32 %v45, %v46
    %s48 = vtos %v47
    %v49 = vstv %s48
    %v50 = vmax.f32 %v41, 1e-08
    %v51 = vmin.f32 %v49, %v50
    %v52 = vadd.f32 %v32, 1e-08
    %v53 = vrcp.pop %v52
    %v54 = vmul.f32 %v51, %v53
    %v55 = vmax.f32 %v54, 0.0
    %v56 = vmin.f32 %v55, 1.0
    %v57 = vmul.f32 %v27, %v56
    %v58 = vadd.f32 %v26, %v57
    %v59 = vld [vmem:[%s2] sm:$0xff]
    %v60 = vld [vmem:[%s3] sm:$0xff]
    %v61 = vsub.f32 %v59, %v60
    %v62 = vand.u32 2147483647, %v61
    %vm63 = vcmask 64512
    %v64 = vsel %vm63, %v62, 0.0
    %65 = vadd.xlane.f32.xlu0 %v64
    %v66 = vpop.xlane.xlu0 %65
    %v67 = vrot.slane %v66, 4
    %v68 = vmin.f32 %v66, %v67
    %v69 = vrot.slane %v68, 2
    %v70 = vmin.f32 %v68, %v69
    %v71 = vrot.slane %v70, 1
    %v72 = vmin.f32 %v70, %v71
    %s73 = vtos %v72
    %v74 = vstv %s73
    %v75 = vmul.f32 %v74, 0.5
    %v76 = vrot.slane %v66, 4
    %v77 = vmax.f32 %v66, %v76
    %v78 = vrot.slane %v77, 2
    %v79 = vmax.f32 %v77, %v78
    %v80 = vrot.slane %v79, 1
    %v81 = vmax.f32 %v79, %v80
    %s82 = vtos %v81
    %v83 = vstv %s82
    %v84 = vmax.f32 %v75, 1e-08
    %v85 = vmin.f32 %v83, %v84
    %v86 = vadd.f32 %v66, 1e-08
    %v87 = vrcp.pop %v86
    %v88 = vmul.f32 %v85, %v87
    %v89 = vmax.f32 %v88, 0.0
    %v90 = vmin.f32 %v89, 1.0
    %v91 = vmul.f32 %v61, %v90
    %v92 = vadd.f32 %v60, %v91
    %v93 = vld [vmem:[%s4] sm:$0xff]
    %v94 = vld [vmem:[%s4 + $0x8] sm:$0xff]
    %v95 = vld [vmem:[%s4 + $0x10] sm:$0xff]
    %v96 = vld [vmem:[%s4 + $0x18] sm:$0xff]
    %v97 = vld [vmem:[%s4 + $0x20] sm:$0xff]
    %v98 = vld [vmem:[%s4 + $0x28] sm:$0xff]
    %v99 = vld [vmem:[%s4 + $0x30] sm:$0xff]
    %v100 = vld [vmem:[%s4 + $0x38] sm:$0xff]
    %v101 = vld [vmem:[%s4 + $0x40] sm:$0xff]
    %v102 = vld [vmem:[%s4 + $0x48] sm:$0xff]
    %v103 = vld [vmem:[%s4 + $0x50] sm:$0xff]
    %v104 = vld [vmem:[%s4 + $0x58] sm:$0xff]
    %v105 = vld [vmem:[%s4 + $0x60] sm:$0xff]
    %v106 = vld [vmem:[%s4 + $0x68] sm:$0xff]
    %v107 = vld [vmem:[%s4 + $0x70] sm:$0xff]
    %v108 = vld [vmem:[%s4 + $0x78] sm:$0xff]
    %v109 = vld [vmem:[%s4 + $0x80] sm:$0xf]
    %v110 = vld [vmem:[%s4 + $0x88] sm:$0xf]
    %v111 = vld [vmem:[%s4 + $0x90] sm:$0xf]
    %v112 = vld [vmem:[%s4 + $0x98] sm:$0xf]
    %v114 = vsel %vm29, %v58, 0
    %vm116 = vcmask 1043456
    %v118 = vsel %vm116, %v109, 0
    %v121 = vsel %vm116, %v110, 0
    %v124 = vsel %vm116, %v111, 0
    %v127 = vsel %vm116, %v112, 0
    %129 = vmatprep.subr.mxu0 %v94
    %130 = vmatpush1.msra.mxu0 %v93
    %131 = vmatprep.subr.mxu0 %v98
    %132 = vmatpush1.msra.mxu0 %v97
    %133 = vmatprep.subr.mxu0 %v102
    %134 = vmatpush1.msra.mxu0 %v101
    %135 = vmatprep.subr.mxu0 %v106
    %136 = vmatpush1.msra.mxu0 %v105
    %137 = vmatprep.subr.mxu0 %v121
    %138 = vmatpush1.msra.mxu0 %v118
    %139 = vmatprep.subr.mxu0 0.0
    %140 = vmatpush1.msra.mxu0 0.0
    %141 = vmatprep.subr.mxu0 0.0
    %142 = vmatpush1.msra.mxu0 0.0
    %143 = vmatprep.subr.mxu0 0.0
    %144 = vmatpush1.msra.mxu0 0.0
    %145 = vmatprep.subr.mxu0 0.0
    %146 = vmatpush1.msra.mxu0 0.0
    %147 = vmatprep.subr.mxu0 0.0
    %148 = vmatpush1.msra.mxu0 0.0
    %149 = vmatprep.subr.mxu0 0.0
    %150 = vmatpush1.msra.mxu0 0.0
    %151 = vmatprep.subr.mxu0 0.0
    %152 = vmatpush1.msra.mxu0 0.0
    %153 = vmatprep.subr.mxu0 0.0
    %154 = vmatpush1.msra.mxu0 0.0
    %155 = vmatprep.subr.mxu0 0.0
    %156 = vmatpush1.msra.mxu0 0.0
    %157 = vmatprep.subr.mxu0 0.0
    %158 = vmatpush1.msra.mxu0 0.0
    %159 = vmatprep.subr.mxu0 0.0
    %160 = vmatpush1.msra.mxu0 0.0
    %161 = vmatprep.subr.mxu0 0.0
    %162 = vmatpush1.msra.mxu0 0.0
    %163 = vmatprep.subr.mxu0 0.0
    %164 = vmatpush1.msra.mxu0 0.0
    %165 = vmatprep.subr.mxu0 0.0
    %166 = vmatpush1.msra.mxu0 0.0
    %167 = vmatprep.subr.mxu0 0.0
    %168 = vmatpush1.msra.mxu0 0.0
    %169 = vmatprep.subr.mxu0 0.0
    %170 = vmatpush1.msra.mxu0 0.0
    %171 = vmatprep.subr.mxu0 0.0
    %172 = vmatpush1.msra.mxu0 0.0
    %173 = vmatprep.subr.mxu0 0.0
    %174 = vmatpush1.msra.mxu0 0.0
    %175 = vmatprep.subr.mxu0 0.0
    %176 = vmatpush1.msra.mxu0 0.0
    %177 = vmatprep.subr.mxu0 0.0
    %178 = vmatpush1.msra.mxu0 0.0
    %179 = vmatprep.subr.mxu0 0.0
    %180 = vmatpush1.msra.mxu0 0.0
    %181 = vmatprep.subr.mxu0 0.0
    %182 = vmatpush1.msra.mxu0 0.0
    %183 = vmatprep.subr.mxu0 0.0
    %184 = vmatpush1.msra.mxu0 0.0
    %185 = vmatprep.subr.mxu0 0.0
    %186 = vmatpush1.msra.mxu0 0.0
    %187 = vmatprep.subr.mxu0 0.0
    %188 = vmatpush1.msra.mxu0 0.0
    %189 = vmatprep.subr.mxu0 0.0
    %190 = vmatpush1.msra.mxu0 0.0
    %191 = vmatprep.subr.mxu0 0.0
    %192 = vmatpush1.msra.mxu0 0.0
    %193 = vmatprep.mubr.f32.mxu0 0.0
    %194 = vmatmul.mubr.f32.gmra.mrb[0].mxu0 %v114
    %v195 = vpop.f32.mrb[0].mxu0
    %v196 = vadd.f32 0.0, %v195
    %v197 = vpop.f32.mrb[0].mxu0
    %v198 = vadd.f32 0.0, %v197
    %199 = vdwg.mxu0
    %200 = vmatprep.subr.mxu0 %v96
    %201 = vmatpush1.msra.mxu0 %v95
    %202 = vmatprep.subr.mxu0 %v100
    %203 = vmatpush1.msra.mxu0 %v99
    %204 = vmatprep.subr.mxu0 %v104
    %205 = vmatpush1.msra.mxu0 %v103
    %206 = vmatprep.subr.mxu0 %v108
    %207 = vmatpush1.msra.mxu0 %v107
    %208 = vmatprep.subr.mxu0 %v127
    %209 = vmatpush1.msra.mxu0 %v124
    %210 = vmatprep.subr.mxu0 0.0
    %211 = vmatpush1.msra.mxu0 0.0
    %212 = vmatprep.subr.mxu0 0.0
    %213 = vmatpush1.msra.mxu0 0.0
    %214 = vmatprep.subr.mxu0 0.0
    %215 = vmatpush1.msra.mxu0 0.0
    %216 = vmatprep.subr.mxu0 0.0
    %217 = vmatpush1.msra.mxu0 0.0
    %218 = vmatprep.subr.mxu0 0.0
    %219 = vmatpush1.msra.mxu0 0.0
    %220 = vmatprep.subr.mxu0 0.0
    %221 = vmatpush1.msra.mxu0 0.0
    %222 = vmatprep.subr.mxu0 0.0
    %223 = vmatpush1.msra.mxu0 0.0
    %224 = vmatprep.subr.mxu0 0.0
    %225 = vmatpush1.msra.mxu0 0.0
    %226 = vmatprep.subr.mxu0 0.0
    %227 = vmatpush1.msra.mxu0 0.0
    %228 = vmatprep.subr.mxu0 0.0
    %229 = vmatpush1.msra.mxu0 0.0
    %230 = vmatprep.subr.mxu0 0.0
    %231 = vmatpush1.msra.mxu0 0.0
    %232 = vmatprep.subr.mxu0 0.0
    %233 = vmatpush1.msra.mxu0 0.0
    %234 = vmatprep.subr.mxu0 0.0
    %235 = vmatpush1.msra.mxu0 0.0
    %236 = vmatprep.subr.mxu0 0.0
    %237 = vmatpush1.msra.mxu0 0.0
    %238 = vmatprep.subr.mxu0 0.0
    %239 = vmatpush1.msra.mxu0 0.0
    %240 = vmatprep.subr.mxu0 0.0
    %241 = vmatpush1.msra.mxu0 0.0
    %242 = vmatprep.subr.mxu0 0.0
    %243 = vmatpush1.msra.mxu0 0.0
    %244 = vmatprep.subr.mxu0 0.0
    %245 = vmatpush1.msra.mxu0 0.0
    %246 = vmatprep.subr.mxu0 0.0
    %247 = vmatpush1.msra.mxu0 0.0
    %248 = vmatprep.subr.mxu0 0.0
    %249 = vmatpush1.msra.mxu0 0.0
    %250 = vmatprep.subr.mxu0 0.0
    %251 = vmatpush1.msra.mxu0 0.0
    %252 = vmatprep.subr.mxu0 0.0
    %253 = vmatpush1.msra.mxu0 0.0
    %254 = vmatprep.subr.mxu0 0.0
    %255 = vmatpush1.msra.mxu0 0.0
    %256 = vmatprep.subr.mxu0 0.0
    %257 = vmatpush1.msra.mxu0 0.0
    %258 = vmatprep.subr.mxu0 0.0
    %259 = vmatpush1.msra.mxu0 0.0
    %260 = vmatprep.subr.mxu0 0.0
    %261 = vmatpush1.msra.mxu0 0.0
    %262 = vmatprep.subr.mxu0 0.0
    %263 = vmatpush1.msra.mxu0 0.0
    %264 = vmatprep.mubr.f32.mxu0 0.0
    %265 = vmatmul.mubr.f32.gmra.mrb[0].mxu0 %v114
    %v266 = vpop.f32.mrb[0].mxu0
    %v267 = vadd.f32 0.0, %v266
    %v268 = vpop.f32.mrb[0].mxu0
    %v269 = vadd.f32 0.0, %v268
    %270 = vdwg.mxu0
    %v271 = vmax.f32 %v196, 0.0
    %v272 = vmax.f32 %v198, 0.0
    %v273 = vmax.f32 %v267, 0.0
    %v274 = vmax.f32 %v269, 0.0
    %v276 = vsel %vm63, %v92, 0
    %278 = vmatprep.subr.mxu0 %v272
    %279 = vmatpush1.msra.mxu0 %v271
    %280 = vmatprep.subr.mxu0 0.0
    %281 = vmatpush1.msra.mxu0 0.0
    %282 = vmatprep.subr.mxu0 0.0
    %283 = vmatpush1.msra.mxu0 0.0
    %284 = vmatprep.subr.mxu0 0.0
    %285 = vmatpush1.msra.mxu0 0.0
    %286 = vmatprep.subr.mxu0 0.0
    %287 = vmatpush1.msra.mxu0 0.0
    %288 = vmatprep.subr.mxu0 0.0
    %289 = vmatpush1.msra.mxu0 0.0
    %290 = vmatprep.subr.mxu0 0.0
    %291 = vmatpush1.msra.mxu0 0.0
    %292 = vmatprep.subr.mxu0 0.0
    %293 = vmatpush1.msra.mxu0 0.0
    %294 = vmatprep.subr.mxu0 0.0
    %295 = vmatpush1.msra.mxu0 0.0
    %296 = vmatprep.subr.mxu0 0.0
    %297 = vmatpush1.msra.mxu0 0.0
    %298 = vmatprep.subr.mxu0 0.0
    %299 = vmatpush1.msra.mxu0 0.0
    %300 = vmatprep.subr.mxu0 0.0
    %301 = vmatpush1.msra.mxu0 0.0
    %302 = vmatprep.subr.mxu0 0.0
    %303 = vmatpush1.msra.mxu0 0.0
    %304 = vmatprep.subr.mxu0 0.0
    %305 = vmatpush1.msra.mxu0 0.0
    %306 = vmatprep.subr.mxu0 0.0
    %307 = vmatpush1.msra.mxu0 0.0
    %308 = vmatprep.subr.mxu0 0.0
    %309 = vmatpush1.msra.mxu0 0.0
    %310 = vmatprep.subr.mxu0 0.0
    %311 = vmatpush1.msra.mxu0 0.0
    %312 = vmatprep.subr.mxu0 0.0
    %313 = vmatpush1.msra.mxu0 0.0
    %314 = vmatprep.subr.mxu0 0.0
    %315 = vmatpush1.msra.mxu0 0.0
    %316 = vmatprep.subr.mxu0 0.0
    %317 = vmatpush1.msra.mxu0 0.0
    %318 = vmatprep.subr.mxu0 0.0
    %319 = vmatpush1.msra.mxu0 0.0
    %320 = vmatprep.subr.mxu0 0.0
    %321 = vmatpush1.msra.mxu0 0.0
    %322 = vmatprep.subr.mxu0 0.0
    %323 = vmatpush1.msra.mxu0 0.0
    %324 = vmatprep.subr.mxu0 0.0
    %325 = vmatpush1.msra.mxu0 0.0
    %326 = vmatprep.subr.mxu0 0.0
    %327 = vmatpush1.msra.mxu0 0.0
    %328 = vmatprep.subr.mxu0 0.0
    %329 = vmatpush1.msra.mxu0 0.0
    %330 = vmatprep.subr.mxu0 0.0
    %331 = vmatpush1.msra.mxu0 0.0
    %332 = vmatprep.subr.mxu0 0.0
    %333 = vmatpush1.msra.mxu0 0.0
    %334 = vmatprep.subr.mxu0 0.0
    %335 = vmatpush1.msra.mxu0 0.0
    %336 = vmatprep.subr.mxu0 0.0
    %337 = vmatpush1.msra.mxu0 0.0
    %338 = vmatprep.subr.mxu0 0.0
    %339 = vmatpush1.msra.mxu0 0.0
    %340 = vmatprep.subr.mxu0 0.0
    %341 = vmatpush1.msra.mxu0 0.0
    %342 = vmatprep.mubr.f32.mxu0 0.0
    %343 = vmatmul.mubr.f32.gmra.mrb[0].mxu0 %v276
    %v344 = vpop.f32.mrb[0].mxu0
    %v345 = vadd.f32 0.0, %v344
    %v346 = vpop.f32.mrb[0].mxu0
    %v347 = vadd.f32 0.0, %v346
    %348 = vdwg.mxu0
    %349 = vmatprep.subr.mxu0 %v274
    %350 = vmatpush1.msra.mxu0 %v273
    %351 = vmatprep.subr.mxu0 0.0
    %352 = vmatpush1.msra.mxu0 0.0
    %353 = vmatprep.subr.mxu0 0.0
    %354 = vmatpush1.msra.mxu0 0.0
    %355 = vmatprep.subr.mxu0 0.0
    %356 = vmatpush1.msra.mxu0 0.0
    %357 = vmatprep.subr.mxu0 0.0
    %358 = vmatpush1.msra.mxu0 0.0
    %359 = vmatprep.subr.mxu0 0.0
    %360 = vmatpush1.msra.mxu0 0.0
    %361 = vmatprep.subr.mxu0 0.0
    %362 = vmatpush1.msra.mxu0 0.0
    %363 = vmatprep.subr.mxu0 0.0
    %364 = vmatpush1.msra.mxu0 0.0
    %365 = vmatprep.subr.mxu0 0.0
    %366 = vmatpush1.msra.mxu0 0.0
    %367 = vmatprep.subr.mxu0 0.0
    %368 = vmatpush1.msra.mxu0 0.0
    %369 = vmatprep.subr.mxu0 0.0
    %370 = vmatpush1.msra.mxu0 0.0
    %371 = vmatprep.subr.mxu0 0.0
    %372 = vmatpush1.msra.mxu0 0.0
    %373 = vmatprep.subr.mxu0 0.0
    %374 = vmatpush1.msra.mxu0 0.0
    %375 = vmatprep.subr.mxu0 0.0
    %376 = vmatpush1.msra.mxu0 0.0
    %377 = vmatprep.subr.mxu0 0.0
    %378 = vmatpush1.msra.mxu0 0.0
    %379 = vmatprep.subr.mxu0 0.0
    %380 = vmatpush1.msra.mxu0 0.0
    %381 = vmatprep.subr.mxu0 0.0
    %382 = vmatpush1.msra.mxu0 0.0
    %383 = vmatprep.subr.mxu0 0.0
    %384 = vmatpush1.msra.mxu0 0.0
    %385 = vmatprep.subr.mxu0 0.0
    %386 = vmatpush1.msra.mxu0 0.0
    %387 = vmatprep.subr.mxu0 0.0
    %388 = vmatpush1.msra.mxu0 0.0
    %389 = vmatprep.subr.mxu0 0.0
    %390 = vmatpush1.msra.mxu0 0.0
    %391 = vmatprep.subr.mxu0 0.0
    %392 = vmatpush1.msra.mxu0 0.0
    %393 = vmatprep.subr.mxu0 0.0
    %394 = vmatpush1.msra.mxu0 0.0
    %395 = vmatprep.subr.mxu0 0.0
    %396 = vmatpush1.msra.mxu0 0.0
    %397 = vmatprep.subr.mxu0 0.0
    %398 = vmatpush1.msra.mxu0 0.0
    %399 = vmatprep.subr.mxu0 0.0
    %400 = vmatpush1.msra.mxu0 0.0
    %401 = vmatprep.subr.mxu0 0.0
    %402 = vmatpush1.msra.mxu0 0.0
    %403 = vmatprep.subr.mxu0 0.0
    %404 = vmatpush1.msra.mxu0 0.0
    %405 = vmatprep.subr.mxu0 0.0
    %406 = vmatpush1.msra.mxu0 0.0
    %407 = vmatprep.subr.mxu0 0.0
    %408 = vmatpush1.msra.mxu0 0.0
    %409 = vmatprep.subr.mxu0 0.0
    %410 = vmatpush1.msra.mxu0 0.0
    %411 = vmatprep.subr.mxu0 0.0
    %412 = vmatpush1.msra.mxu0 0.0
    %413 = vmatprep.mubr.f32.mxu0 0.0
    %414 = vmatmul.mubr.f32.gmra.mrb[0].mxu0 %v276
    %v415 = vpop.f32.mrb[0].mxu0
    %v416 = vadd.f32 0.0, %v415
    %v417 = vpop.f32.mrb[0].mxu0
    %v418 = vadd.f32 0.0, %v417
    %419 = vdwg.mxu0
    %420 = vst [vmem:[%s5] sm:$0xff] %v345
    %421 = vst [vmem:[%s5 + $0x8] sm:$0xff] %v347
    %422 = vst [vmem:[%s5 + $0x10] sm:$0xff] %v416
    %423 = vst [vmem:[%s5 + $0x18] sm:$0xff] %v418
    %vm424 = vcmask 0
    %425 = vst.msk [vmem:[#allocation2] sm:$0x1] %vm424, %v51
    %426 = vst.msk [vmem:[#allocation4] sm:$0x1] %vm424, %v85
    // Predicated region
    $region22: #{_tpgm_forward_impl.1} parent=1 // pred_check
      _
    $region23: #{_tpgm_forward_impl.1} parent=1 // pred_check_branch
      %428 = sbr.rel (0) target = $region25
    $region24: #{_tpgm_forward_impl.1} parent=1 // pred_region
      _
    $region25: #{_tpgm_forward_impl.1} parent=1 // pred_fallthru
      _
    // Predicated region
    $region26: #{_tpgm_forward_impl.1} parent=1 // pred_check
      _
    $region27: #{_tpgm_forward_impl.1} parent=1 // pred_check_branch
      %430 = sbr.rel (0) target = $region29
    $region28: #{_tpgm_forward_impl.1} parent=1 // pred_region
      %s432 = ssub.s32 16, 16
      %433 = vsyncadd [#allocation3], %s432
      %s435 = sshll.u32 [#allocation2], 4
      %s436 = int_to_ptr.vmem [resolvable:$true] %s435
      %438 = dma.vmem_to_hbm [thread:$0]  %s436, 16, %s6, [#allocation3]
    $region29: #{_tpgm_forward_impl.1} parent=1 // pred_fallthru
      _
    // Predicated region
    $region30: #{_tpgm_forward_impl.1} parent=1 // pred_check
      _
    $region31: #{_tpgm_forward_impl.1} parent=1 // pred_check_branch
      %440 = sbr.rel (0) target = $region33
    $region32: #{_tpgm_forward_impl.1} parent=1 // pred_region
      %s442 = ssub.s32 16, 16
      %443 = vsyncadd [#allocation5], %s442
      %s445 = sshll.u32 [#allocation4], 4
      %s446 = int_to_ptr.vmem [resolvable:$true] %s445
      %448 = dma.vmem_to_hbm [thread:$0]  %s446, 16, %s7, [#allocation5]
    $region33: #{_tpgm_forward_impl.1} parent=1 // pred_fallthru
      _
    // Predicated region
    $region34: #{_tpgm_forward_impl.1} parent=1 // pred_check
      _
    $region35: #{_tpgm_forward_impl.1} parent=1 // pred_check_branch
      %450 = sbr.rel (0) target = $region37
    $region36: #{_tpgm_forward_impl.1} parent=1 // pred_region
      _
    $region37: #{_tpgm_forward_impl.1} parent=1 // pred_fallthru
      _
    // Predicated region
    $region38: #{_tpgm_forward_impl.1} parent=1 // pred_check
      _
    $region39: #{_tpgm_forward_impl.1} parent=1 // pred_check_branch
      %452 = sbr.rel (0) target = $region41
    $region40: #{_tpgm_forward_impl.1} parent=1 // pred_region
      %453 = dma.done [#allocation3], 16
    $region41: #{_tpgm_forward_impl.1} parent=1 // pred_fallthru
      _
    // Predicated region
    $region42: #{_tpgm_forward_impl.1} parent=1 // pred_check
      _
    $region43: #{_tpgm_forward_impl.1} parent=1 // pred_check_branch
      %455 = sbr.rel (0) target = $region45
    $region44: #{_tpgm_forward_impl.1} parent=1 // pred_region
      %456 = dma.done [#allocation5], 16
    $region45: #{_tpgm_forward_impl.1} parent=1 // pred_fallthru
      _
    %457 = vsyncpa [#allocation3], 1
    %458 = vsyncpa [#allocation5], 1

</llo_original>
